<compile_context>
chip_gen: v7x
topology: tpu7x:2x2x1
jax: 0.10.0
libtpu: 0.0.40
codegen_flags: <defaults>
</compile_context>

<pallas_src>
import math

import jax
import jax.numpy as jnp
from jax.experimental import pallas as pl
from jax.experimental.pallas import tpu as pltpu


def _round_up(a: int, b: int) -> int:
    return ((a + b - 1) // b) * b


def _default_vmem_limit() -> int:
    """Generation-aware scoped-VMEM request with compiler headroom."""
    try:
        cap = pltpu.get_tpu_info().vmem_capacity_bytes
    except Exception:
        cap = 128 * 1024 * 1024  # v5e/v6e physical; conservative fallback
    # 3/4 of physical, capped at 96 MiB: ~48 MiB on v7x, 96 MiB on v5e/v6e.
    return min((cap * 3) // 4, 96 * 1024 * 1024)


# ---------------------------------------------------------------------------
# Kernel
# ---------------------------------------------------------------------------
def mlm_head_kernel(x_ref, w1t_ref, b1_ref, gamma_ref, beta_ref,
                    wdt_ref, bias_ref, o_ref, h_ref):
    """Grid = (vocab_split, row_tiles, vocab_tiles); vocab axis innermost."""
    j = pl.program_id(2)  # vocab tile index within this split (sequential)

    # ---- transform + GELU + LayerNorm: once per (split, row tile), cached ----
    @pl.when(j == 0)
    def _():
        w1t = w1t_ref[...]                                  # (E, E) = W1^T
        x = x_ref[...].astype(w1t.dtype)                    # (tile_m, E)
        h = jnp.dot(x, w1t, preferred_element_type=jnp.float32)
        h = h + b1_ref[...]

        # exact erf-based GELU (torch.nn.GELU default)
        inv_sqrt2 = jnp.float32(1.0 / math.sqrt(2.0))
        h = 0.5 * h * (1.0 + jax.lax.erf(h * inv_sqrt2))

        # LayerNorm over the embedding axis (eps = 1e-5, biased variance)
        mean = jnp.mean(h, axis=-1, keepdims=True)
        var = jnp.mean(jnp.square(h - mean), axis=-1, keepdims=True)
        h = (h - mean) * jax.lax.rsqrt(var + jnp.float32(1e-5))
        h = h * gamma_ref[...] + beta_ref[...]
        # Single cast to the matmul dtype; inner loop reuses it as-is.
        h_ref[...] = h.astype(h_ref.dtype)

    # ---- decoder for this vocab tile: plain (M,K)x(K,N) matmul + fused bias ----
    logits = jnp.dot(h_ref[...], wdt_ref[...],
                     preferred_element_type=jnp.float32)    # (tile_m, tile_v)
    o_ref[...] = (logits + bias_ref[...]).astype(o_ref.dtype)


# ---------------------------------------------------------------------------
# Parameter preparation (do this ONCE per model, outside the hot path)
# ---------------------------------------------------------------------------
def prepare_mlm_head_params(w1, b1, gamma, beta, token_embedding_weight,
                            decoder_bias, extra_bias, *,
                            matmul_dtype=jnp.bfloat16,
                            tile_v=1024, vocab_splits=1):
    """Pads / fuses / transposes / casts the MLM-head parameters.

    Returns (params, meta). `params` holds device arrays ready for the kernel
    (no per-call padding or casting of the big tied embedding); `meta` carries
    the tiling decisions baked into those arrays.

    Tile guidance:  v5e: tile_m~512, tile_v 512-1024;  v6e: tile_m 512,
    tile_v up to 2048;  v7x (64 MiB VMEM): tile_m 384-512, tile_v 512-1024,
    and consider vocab_splits=2 for small-M (few masked positions) calls.
    """
    E = w1.shape[1]
    V = token_embedding_weight.shape[0]

    V_pad = _round_up(V, 128)                 # lane-align only; no tile rounding
    tile_v = min(int(tile_v), V_pad)
    tile_v = max(128, (tile_v // 128) * 128)
    if vocab_splits > 1:
        # Even split of vocab tiles across the leading "parallel" axis.
        per_split = _round_up(pl.cdiv(V_pad, vocab_splits), 128)
        tile_v = min(tile_v, per_split)
        V_pad = _round_up(V_pad, tile_v * vocab_splits)

    # Fuse decoder bias and the extra MLM bias; pad vocab.
    wd = token_embedding_weight
    fused_bias = (decoder_bias + extra_bias).reshape(1, V).astype(jnp.float32)
    if V_pad != V:
        wd = jnp.pad(wd, ((0, V_pad - V), (0, 0)))
        fused_bias = jnp.pad(fused_bias, ((0, 0), (0, V_pad - V)))

    params = dict(
        # Pre-transposed so both matmuls are plain (M,K)x(K,N) on the MXU.
        w1_t=jnp.transpose(w1.astype(matmul_dtype)),        # (E, E) == W1^T
        b1=b1.reshape(1, E).astype(jnp.float32),
        gamma=gamma.reshape(1, E).astype(jnp.float32),
        beta=beta.reshape(1, E).astype(jnp.float32),
        wd_t=jnp.transpose(wd.astype(matmul_dtype)),         # (E, V_pad)
        fused_bias=fused_bias,                                # (1, V_pad) f32
    )
    meta = dict(embed_dim=E, vocab_size=V, vocab_pad=V_pad, tile_v=tile_v,
                vocab_splits=int(vocab_splits),
                matmul_dtype=jnp.dtype(matmul_dtype))
    return params, meta


# ---------------------------------------------------------------------------
# Kernel launch on prepared parameters
# ---------------------------------------------------------------------------
def mlm_head_apply(x, params, meta, *, tile_m=512, out_dtype=None,
                   vmem_limit_bytes=None):
    """x: (batch, seq, embed_dim) -> logits: (batch, seq, vocab_size)."""
    B, S, E = x.shape
    assert E == meta["embed_dim"]
    V, V_pad = meta["vocab_size"], meta["vocab_pad"]
    tile_v, splits = meta["tile_v"], meta["vocab_splits"]
    mm_dtype = meta["matmul_dtype"]
    out_dtype = x.dtype if out_dtype is None else out_dtype

    M = B * S
    M_pad = _round_up(M, 8)
    tile_m = min(int(tile_m), M_pad)
    tile_m = max(8, _round_up(tile_m, 8))

    x2d = x.reshape(M, E)
    if M_pad != M:
        x2d = jnp.pad(x2d, ((0, M_pad - M), (0, 0)))

    grid_m = pl.cdiv(M_pad, tile_m)
    if splits > 1:
        grid_v_per = (V_pad // tile_v) // splits       # exact by construction
    else:
        grid_v_per = pl.cdiv(V_pad, tile_v)            # partial last tile OK
    grid = (splits, grid_m, grid_v_per)

    if vmem_limit_bytes is None:
        vmem_limit_bytes = _default_vmem_limit()

    def vcol(c, j):
        return c * grid_v_per + j

    out = pl.pallas_call(
        mlm_head_kernel,
        out_shape=jax.ShapeDtypeStruct((M_pad, V_pad), out_dtype),
        grid_spec=pltpu.PrefetchScalarGridSpec(
            num_scalar_prefetch=0,
            grid=grid,
            in_specs=[
                pl.BlockSpec((tile_m, E), lambda c, i, j: (i, 0)),        # x rows
                pl.BlockSpec((E, E),      lambda c, i, j: (0, 0)),        # W1^T
                pl.BlockSpec((1, E),      lambda c, i, j: (0, 0)),        # b1
                pl.BlockSpec((1, E),      lambda c, i, j: (0, 0)),        # gamma
                pl.BlockSpec((1, E),      lambda c, i, j: (0, 0)),        # beta
                pl.BlockSpec((E, tile_v), lambda c, i, j: (0, vcol(c, j))),  # Wd^T tile
                pl.BlockSpec((1, tile_v), lambda c, i, j: (0, vcol(c, j))),  # fused bias
            ],
            out_specs=pl.BlockSpec((tile_m, tile_v),
                                   lambda c, i, j: (i, vcol(c, j))),
            # h cache in the matmul dtype (half the scratch of f32 for bf16).
            scratch_shapes=[pltpu.VMEM((tile_m, E), mm_dtype)],
        ),
        compiler_params=pltpu.CompilerParams(
            # vocab axis stays innermost + "arbitrary" so the j==0 h-cache is
            # always (re)filled before use on every core shard.
            dimension_semantics=("parallel", "parallel", "arbitrary"),
            vmem_limit_bytes=int(vmem_limit_bytes)),
    )(x2d, params["w1_t"], params["b1"], params["gamma"], params["beta"],
      params["wd_t"], params["fused_bias"])

    if M_pad != M or V_pad != V:
        out = out[:M, :V]
    return out.reshape(B, S, V)


# ---------------------------------------------------------------------------
# Convenience one-shot wrapper (pays the prepare cost per call; prefer
# prepare_mlm_head_params + mlm_head_apply in real use).
# ---------------------------------------------------------------------------
def mlm_head(x, w1, b1, gamma, beta, token_embedding_weight, decoder_bias,
             extra_bias, *, tile_m=512, tile_v=1024,
             matmul_dtype=jnp.bfloat16, vocab_splits=1, out_dtype=None,
             vmem_limit_bytes=None):
    params, meta = prepare_mlm_head_params(
        w1, b1, gamma, beta, token_embedding_weight, decoder_bias, extra_bias,
        matmul_dtype=matmul_dtype, tile_v=tile_v, vocab_splits=vocab_splits)
    return mlm_head_apply(x, params, meta, tile_m=tile_m, out_dtype=out_dtype,
                          vmem_limit_bytes=vmem_limit_bytes)


def reference_mlm_head(x, w1, b1, gamma, beta, wd, bd, extra_bias):
    """Plain-JAX reference mirroring the PyTorch forward pass."""
    h = x @ w1.T + b1
    h = 0.5 * h * (1.0 + jax.lax.erf(h / jnp.float32(math.sqrt(2.0))))
    mean = jnp.mean(h, axis=-1, keepdims=True)
    var = jnp.mean((h - mean) ** 2, axis=-1, keepdims=True)
    h = (h - mean) * jax.lax.rsqrt(var + 1e-5)
    h = h * gamma + beta
    return h @ wd.T + bd + extra_bias


if __name__ == "__main__":
    # Small shapes consistent with the module; vocab intentionally NOT a
    # multiple of 128 and batch*seq NOT a multiple of 8 to exercise padding
    # and partial-tile handling.
    batch, seq, embed_dim, vocab_size = 2, 9, 128, 250

    key = jax.random.PRNGKey(0)
    k_x, k_w1, k_b1, k_emb, k_bd = jax.random.split(key, 5)

    x = jax.random.normal(k_x, (batch, seq, embed_dim), dtype=jnp.float32)

    # Deterministic synthetic parameters (no checkpoint load).
    lim1 = 1.0 / math.sqrt(embed_dim)
    w1 = jax.random.uniform(k_w1, (embed_dim, embed_dim), jnp.float32, -lim1, lim1)
    b1 = jax.random.uniform(k_b1, (embed_dim,), jnp.float32, -lim1, lim1)
    gamma = jnp.ones((embed_dim,), jnp.float32)
    beta = jnp.zeros((embed_dim,), jnp.float32)
    token_embedding_weight = jax.random.normal(
        k_emb, (vocab_size, embed_dim), dtype=jnp.float32) * 0.02
    bd = jax.random.uniform(k_bd, (vocab_size,), jnp.float32, -lim1, lim1)
    extra_bias = jnp.zeros((vocab_size,), jnp.float32)  # nn.Parameter(zeros)

    ref = reference_mlm_head(x, w1, b1, gamma, beta,
                             token_embedding_weight, bd, extra_bias)

    # 1) f32 MXU path with small tiles: exercises multiple row/vocab tiles and
    #    the cached-h pattern; tight tolerance.
    logits_f32 = mlm_head(x, w1, b1, gamma, beta, token_embedding_weight, bd,
                          extra_bias, matmul_dtype=jnp.float32,
                          tile_m=8, tile_v=128)
    logits_f32 = jax.block_until_ready(logits_f32)
    assert logits_f32.shape == (batch, seq, vocab_size)
    err_f32 = float(jnp.max(jnp.abs(logits_f32 - ref)))
    assert jnp.allclose(logits_f32, ref, atol=1e-3, rtol=1e-3), err_f32

    # 2) Default fast path: bf16 weights/activations on the MXU, f32 accum.
    logits_bf16 = mlm_head(x, w1, b1, gamma, beta, token_embedding_weight, bd,
                           extra_bias)
    logits_bf16 = jax.block_until_ready(logits_bf16)
    err_bf16 = float(jnp.max(jnp.abs(logits_bf16 - ref)))
    assert jnp.allclose(logits_bf16, ref, atol=5e-2, rtol=5e-2), err_bf16

    # 3) Prepare-once path with a 2-way vocab split (v7x two-TensorCore mode
    #    for small-M calls); identical semantics on 1-TC chips.
    params, meta = prepare_mlm_head_params(
        w1, b1, gamma, beta, token_embedding_weight, bd, extra_bias,
        matmul_dtype=jnp.bfloat16, tile_v=1024, vocab_splits=2)
    logits_split = mlm_head_apply(x, params, meta, tile_m=512)
    logits_split = jax.block_until_ready(logits_split)
    assert logits_split.shape == (batch, seq, vocab_size)
    err_split = float(jnp.max(jnp.abs(logits_split - ref)))
    assert jnp.allclose(logits_split, ref, atol=5e-2, rtol=5e-2), err_split

    print("KERNEL_OK")
</pallas_src>

<mosaic_0001>
module attributes {stable_mosaic.version = 11 : i64} {
  func.func @mlm_head_kernel(%arg0: i32, %arg1: i32, %arg2: i32, %arg3: memref<8x128xf32, #tpu.memory_space<vmem>>, %arg4: memref<128x128xf32, #tpu.memory_space<vmem>>, %arg5: memref<1x128xf32, #tpu.memory_space<vmem>>, %arg6: memref<1x128xf32, #tpu.memory_space<vmem>>, %arg7: memref<1x128xf32, #tpu.memory_space<vmem>>, %arg8: memref<128x128xf32, #tpu.memory_space<vmem>>, %arg9: memref<1x128xf32, #tpu.memory_space<vmem>>, %arg10: memref<8x128xf32, #tpu.memory_space<vmem>>, %arg11: memref<8x128xf32, #tpu.memory_space<vmem>>) attributes {dimension_semantics = [#tpu.dimension_semantics<parallel>, #tpu.dimension_semantics<parallel>, #tpu.dimension_semantics<arbitrary>], iteration_bounds = array<i64: 1, 3, 2>, scalar_prefetch = 0 : i64, scratch_operands = 1 : i64, tpu.core_type = #tpu.core_type<tc>, window_params = [{transform_indices = @transform_0, window_bounds = array<i64: 8, 128>}, {pipeline_mode = #tpu.pipeline_mode<synchronous>, transform_indices = @transform_1, window_bounds = array<i64: 128, 128>}, {pipeline_mode = #tpu.pipeline_mode<synchronous>, transform_indices = @transform_2, window_bounds = array<i64: 1, 128>}, {pipeline_mode = #tpu.pipeline_mode<synchronous>, transform_indices = @transform_3, window_bounds = array<i64: 1, 128>}, {pipeline_mode = #tpu.pipeline_mode<synchronous>, transform_indices = @transform_4, window_bounds = array<i64: 1, 128>}, {transform_indices = @transform_5, window_bounds = array<i64: 128, 128>}, {transform_indices = @transform_6, window_bounds = array<i64: 1, 128>}, {transform_indices = @transform_7, window_bounds = array<i64: 8, 128>}]} {
    %c0_i32 = arith.constant 0 : i32
    %0 = arith.cmpi eq, %arg2, %c0_i32 : i32
    %1 = arith.extui %0 : i1 to i32
    %c0_i32_0 = arith.constant 0 : i32
    %2 = arith.cmpi ne, %1, %c0_i32_0 : i32
    scf.if %2 {
      %c0_8 = arith.constant 0 : index
      %c0_9 = arith.constant 0 : index
      %10 = vector.load %arg4[%c0_8, %c0_9] : memref<128x128xf32, #tpu.memory_space<vmem>>, vector<128x128xf32>
      %c0_10 = arith.constant 0 : index
      %c0_11 = arith.constant 0 : index
      %11 = vector.load %arg3[%c0_10, %c0_11] : memref<8x128xf32, #tpu.memory_space<vmem>>, vector<8x128xf32>
      %cst_12 = arith.constant dense<0.000000e+00> : vector<8x128xf32>
      %12 = tpu.matmul %11, %10, %cst_12 {dimension_numbers = #tpu.dot_dimension_numbers<[1], [0], [0], [1], [0, 0, 1, 1], [], []>} : vector<8x128xf32>, vector<128x128xf32>, vector<8x128xf32> -> vector<8x128xf32>
      %c0_13 = arith.constant 0 : index
      %c0_14 = arith.constant 0 : index
      %13 = vector.load %arg5[%c0_13, %c0_14] : memref<1x128xf32, #tpu.memory_space<vmem>>, vector<1x128xf32>
      %14 = vector.broadcast %13 : vector<1x128xf32> to vector<8x128xf32>
      %15 = arith.addf %12, %14 : vector<8x128xf32>
      %cst_15 = arith.constant 5.000000e-01 : f32
      %16 = vector.broadcast %cst_15 : f32 to vector<8x128xf32>
      %17 = arith.mulf %16, %15 : vector<8x128xf32>
      %cst_16 = arith.constant 0.707106769 : f32
      %18 = vector.broadcast %cst_16 : f32 to vector<8x128xf32>
      %19 = arith.mulf %15, %18 : vector<8x128xf32>
      %20 = math.erf %19 : vector<8x128xf32>
      %cst_17 = arith.constant 1.000000e+00 : f32
      %21 = vector.broadcast %cst_17 : f32 to vector<8x128xf32>
      %22 = arith.addf %21, %20 : vector<8x128xf32>
      %23 = arith.mulf %17, %22 : vector<8x128xf32>
      %cst_18 = arith.constant dense<0.000000e+00> : vector<8xf32>
      %24 = vector.multi_reduction <add>, %23, %cst_18 [1] : vector<8x128xf32> to vector<8xf32>
      %25 = vector.shape_cast %24 : vector<8xf32> to vector<8x1xf32>
      %cst_19 = arith.constant 1.280000e+02 : f32
      %26 = vector.broadcast %cst_19 : f32 to vector<8x1xf32>
      %27 = arith.divf %25, %26 : vector<8x1xf32>
      %28 = vector.broadcast %27 : vector<8x1xf32> to vector<8x128xf32>
      %29 = arith.subf %23, %28 : vector<8x128xf32>
      %30 = arith.mulf %29, %29 : vector<8x128xf32>
      %cst_20 = arith.constant dense<0.000000e+00> : vector<8xf32>
      %31 = vector.multi_reduction <add>, %30, %cst_20 [1] : vector<8x128xf32> to vector<8xf32>
      %32 = vector.shape_cast %31 : vector<8xf32> to vector<8x1xf32>
      %cst_21 = arith.constant 1.280000e+02 : f32
      %33 = vector.broadcast %cst_21 : f32 to vector<8x1xf32>
      %34 = arith.divf %32, %33 : vector<8x1xf32>
      %35 = vector.broadcast %27 : vector<8x1xf32> to vector<8x128xf32>
      %36 = arith.subf %23, %35 : vector<8x128xf32>
      %cst_22 = arith.constant 9.99999974E-6 : f32
      %37 = vector.broadcast %cst_22 : f32 to vector<8x1xf32>
      %38 = arith.addf %34, %37 : vector<8x1xf32>
      %39 = math.rsqrt %38 : vector<8x1xf32>
      %40 = vector.broadcast %39 : vector<8x1xf32> to vector<8x128xf32>
      %41 = arith.mulf %36, %40 : vector<8x128xf32>
      %c0_23 = arith.constant 0 : index
      %c0_24 = arith.constant 0 : index
      %42 = vector.load %arg6[%c0_23, %c0_24] : memref<1x128xf32, #tpu.memory_space<vmem>>, vector<1x128xf32>
      %43 = vector.broadcast %42 : vector<1x128xf32> to vector<8x128xf32>
      %44 = arith.mulf %41, %43 : vector<8x128xf32>
      %c0_25 = arith.constant 0 : index
      %c0_26 = arith.constant 0 : index
      %45 = vector.load %arg7[%c0_25, %c0_26] : memref<1x128xf32, #tpu.memory_space<vmem>>, vector<1x128xf32>
      %46 = vector.broadcast %45 : vector<1x128xf32> to vector<8x128xf32>
      %47 = arith.addf %44, %46 : vector<8x128xf32>
      %c0_27 = arith.constant 0 : index
      %c0_28 = arith.constant 0 : index
      %48 = vector.load %arg11[%c0_27, %c0_28] : memref<8x128xf32, #tpu.memory_space<vmem>>, vector<8x128xf32>
      tpu.vector_store %arg11[%c0_27, %c0_28], %47 {strides = array<i32>} : memref<8x128xf32, #tpu.memory_space<vmem>>, vector<8x128xf32>,
    } else {
    }
    %c0 = arith.constant 0 : index
    %c0_1 = arith.constant 0 : index
    %3 = vector.load %arg11[%c0, %c0_1] : memref<8x128xf32, #tpu.memory_space<vmem>>, vector<8x128xf32>
    %c0_2 = arith.constant 0 : index
    %c0_3 = arith.constant 0 : index
    %4 = vector.load %arg8[%c0_2, %c0_3] : memref<128x128xf32, #tpu.memory_space<vmem>>, vector<128x128xf32>
    %cst = arith.constant dense<0.000000e+00> : vector<8x128xf32>
    %5 = tpu.matmul %3, %4, %cst {dimension_numbers = #tpu.dot_dimension_numbers<[1], [0], [0], [1], [0, 0, 1, 1], [], []>} : vector<8x128xf32>, vector<128x128xf32>, vector<8x128xf32> -> vector<8x128xf32>
    %c0_4 = arith.constant 0 : index
    %c0_5 = arith.constant 0 : index
    %6 = vector.load %arg9[%c0_4, %c0_5] : memref<1x128xf32, #tpu.memory_space<vmem>>, vector<1x128xf32>
    %7 = vector.broadcast %6 : vector<1x128xf32> to vector<8x128xf32>
    %8 = arith.addf %5, %7 : vector<8x128xf32>
    %c0_6 = arith.constant 0 : index
    %c0_7 = arith.constant 0 : index
    %9 = vector.load %arg10[%c0_6, %c0_7] : memref<8x128xf32, #tpu.memory_space<vmem>>, vector<8x128xf32>
    tpu.vector_store %arg10[%c0_6, %c0_7], %8 {strides = array<i32>} : memref<8x128xf32, #tpu.memory_space<vmem>>, vector<8x128xf32>,
    return
  }
  func.func @transform_0(%arg0: i32, %arg1: i32, %arg2: i32) -> (i32, i32) {
    %c0_i32 = arith.constant 0 : i32
    %c0_i32_0 = arith.constant 0 : i32
    return %arg1, %c0_i32 : i32, i32
  }
  func.func @transform_1(%arg0: i32, %arg1: i32, %arg2: i32) -> (i32, i32) {
    %c0_i32 = arith.constant 0 : i32
    %c0_i32_0 = arith.constant 0 : i32
    %c0_i32_1 = arith.constant 0 : i32
    return %c0_i32, %c0_i32_0 : i32, i32
  }
  func.func @transform_2(%arg0: i32, %arg1: i32, %arg2: i32) -> (i32, i32) {
    %c0_i32 = arith.constant 0 : i32
    %c0_i32_0 = arith.constant 0 : i32
    %c0_i32_1 = arith.constant 0 : i32
    return %c0_i32, %c0_i32_0 : i32, i32
  }
  func.func @transform_3(%arg0: i32, %arg1: i32, %arg2: i32) -> (i32, i32) {
    %c0_i32 = arith.constant 0 : i32
    %c0_i32_0 = arith.constant 0 : i32
    %c0_i32_1 = arith.constant 0 : i32
    return %c0_i32, %c0_i32_0 : i32, i32
  }
  func.func @transform_4(%arg0: i32, %arg1: i32, %arg2: i32) -> (i32, i32) {
    %c0_i32 = arith.constant 0 : i32
    %c0_i32_0 = arith.constant 0 : i32
    %c0_i32_1 = arith.constant 0 : i32
    return %c0_i32, %c0_i32_0 : i32, i32
  }
  func.func @transform_5(%arg0: i32, %arg1: i32, %arg2: i32) -> (i32, i32) {
    %c2_i32 = arith.constant 2 : i32
    %0 = arith.muli %arg0, %c2_i32 : i32
    %1 = arith.addi %0, %arg2 : i32
    %c0_i32 = arith.constant 0 : i32
    %c0_i32_0 = arith.constant 0 : i32
    return %c0_i32, %1 : i32, i32
  }
  func.func @transform_6(%arg0: i32, %arg1: i32, %arg2: i32) -> (i32, i32) {
    %c2_i32 = arith.constant 2 : i32
    %0 = arith.muli %arg0, %c2_i32 : i32
    %1 = arith.addi %0, %arg2 : i32
    %c0_i32 = arith.constant 0 : i32
    %c0_i32_0 = arith.constant 0 : i32
    return %c0_i32, %1 : i32, i32
  }
  func.func @transform_7(%arg0: i32, %arg1: i32, %arg2: i32) -> (i32, i32) {
    %c2_i32 = arith.constant 2 : i32
    %0 = arith.muli %arg0, %c2_i32 : i32
    %1 = arith.addi %0, %arg2 : i32
    %c0_i32 = arith.constant 0 : i32
    return %arg1, %1 : i32, i32
  }
}

</mosaic_0001>

<llo_original>
// kernel: tpu_custom_call.1
$region0: #{tpu_custom_call.1}
  #allocation0 [shape = 'u32[]', space=smem, size = 0x4, offset = 0x4, fixed_abs, tag = 'smem constant byte address 0x4 - core index']
  #allocation1 [shape = 'u32[144,128]{1,0:T(1,128)}', space=vmem, size = 0x12000, scoped, tag = 'internal scratch']
  #allocation2 [shape = 'f32[8,128]{1,0:T(8,128)}', space=vmem, size = 0x1000, scoped, tag = 'scratch operand']
  %s0 = inlined_call_operand.hbm [shape: f32[24,128], index: 0, kind: input, shape index: {}]
  %s1 = inlined_call_operand.hbm [shape: f32[128,128], index: 1, kind: input, shape index: {}]
  %s2 = inlined_call_operand.hbm [shape: f32[1,128], index: 2, kind: input, shape index: {}]
  %s3 = inlined_call_operand.hbm [shape: f32[1,128], index: 3, kind: input, shape index: {}]
  %s4 = inlined_call_operand.hbm [shape: f32[1,128], index: 4, kind: input, shape index: {}]
  %s5 = inlined_call_operand.hbm [shape: f32[128,256], index: 5, kind: input, shape index: {}]
  %s6 = inlined_call_operand.hbm [shape: f32[1,256], index: 6, kind: input, shape index: {}]
  %s7 = inlined_call_operand.hbm [shape: f32[24,256], index: 7, kind: output, shape index: {}]
  %s8 = sld [smem:[#allocation0]]
  $region93: #{tpu_custom_call.1} parent=0
    _
  %s10 = ssub.s32 1, %s8
  %s11 = scalar_select 0, %s10, %s8
  $region1: #{tpu_custom_call.1} parent=0
    #allocation3 [shape = 'u8[8192]{0}', space=vmem, size = 0x2000, scoped, tag = 'input window, operand 0']
    #allocation4 [shape = 's32[2]{0}', space=sflag, size = 0x8, scoped, tag = 'scoped memory for tpu_custom_call.1']
    #allocation5 [shape = 's32[2]{0}', space=sflag, size = 0x8, scoped, tag = 'scoped memory for tpu_custom_call.1']
    #allocation6 [shape = 'u8[65536]{0}', space=vmem, size = 0x10000, scoped, tag = 'input window, operand 1, single buffered']
    #allocation7 [shape = 's32[1]{0}', space=sflag, size = 0x4, scoped, tag = 'scoped memory for tpu_custom_call.1']
    #allocation8 [shape = 'u8[512]{0}', space=vmem, size = 0x400, scoped, tag = 'input window, operand 2, single buffered']
    #allocation9 [shape = 'u8[512]{0}', space=vmem, size = 0x400, scoped, tag = 'input window, operand 3, single buffered']
    #allocation10 [shape = 's32[1]{0}', space=sflag, size = 0x4, scoped, tag = 'scoped memory for tpu_custom_call.1']
    #allocation11 [shape = 'u8[512]{0}', space=vmem, size = 0x400, scoped, tag = 'input window, operand 4, single buffered']
    #allocation12 [shape = 'u8[131072]{0}', space=vmem, size = 0x20000, scoped, tag = 'input window, operand 5']
    #allocation13 [shape = 's32[2]{0}', space=sflag, size = 0x8, scoped, tag = 'scoped memory for tpu_custom_call.1']
    #allocation14 [shape = 'u8[1024]{0}', space=vmem, size = 0x400, scoped, tag = 'input window, operand 6']
    #allocation15 [shape = 'u8[8192]{0}', space=vmem, size = 0x2000, scoped, tag = 'output window, operand 0']
    %12 = vsyncpa [#allocation4], 0
    %s13 = scalar_lea.sflag [#allocation4], 1
    %14 = vsyncpa %s13, 0
    %15 = vsyncpa [#allocation7], 0
    %16 = vsyncpa [#allocation10], 0
    %17 = vsyncpa [#allocation13], 0
    %s18 = scalar_lea.sflag [#allocation13], 1
    %19 = vsyncpa %s18, 0
    %20 = vsyncpa [#allocation5], 0
    %s21 = scalar_lea.sflag [#allocation5], 1
    %22 = vsyncpa %s21, 0
    loop: start=0, step=1, limit=8
    $region2: #{tpu_custom_call.1} parent=1 // loop_pre_header
      _
    $region3: #{tpu_custom_call.1} parent=1 // loop_header
      %s24 = sphi 0, %s28
      %p25 = scmp.ge.s32.totalorder %s24, 8
      %s31 = sphi 0, %s50
      %s32 = sphi 0, %s46
      %s33 = sphi 0, %s42
      %s34 = sphi 0, %s31
      %s35 = sphi 0, %s32
      %s36 = sphi 0, %s33
      %s37 = sphi 0, %s34
      %s38 = sphi 0, %s35
      %s39 = sphi 0, %s36
      %s53 = sphi 0, %s55
      %s56 = sphi 0, %s53
      %s57 = sphi 0, %s56
      %s73 = sphi 0, %s57
      %s77 = sphi 0, %s77
      %s79 = sphi 0, %s77
      %s80 = sphi 0, %s79
      %s94 = sphi 0, %s80
      %s98 = sphi 0, %s98
      %s100 = sphi 0, %s98
      %s101 = sphi 0, %s100
      %s115 = sphi 0, %s101
      %s119 = sphi 0, %s119
      %s121 = sphi 0, %s119
      %s122 = sphi 0, %s121
      %s136 = sphi 0, %s122
      %s140 = sphi 0, %s140
      %s142 = sphi 0, %s140
      %s143 = sphi 0, %s142
      %s157 = sphi 0, %s143
      %s167 = sphi 0, %s169
      %s170 = sphi 0, %s167
      %s171 = sphi 0, %s170
      %s187 = sphi 0, %s171
      %s197 = sphi 0, %s199
      %s200 = sphi 0, %s197
      %s201 = sphi 0, %s200
      %s217 = sphi 0, %s201
      %s229 = sphi 0, %s231
      %s232 = sphi 0, %s229
      %s233 = sphi 0, %s232
      %s249 = sphi 0, %s233
    $region4: #{tpu_custom_call.1} parent=1 // loop_header_branch
      %27 = sbr.rel (%p25) target = $region8
    $region5: #{tpu_custom_call.1} parent=1 // loop_body
      %s29 = ssub.s32 %s24, 1
      %s30 = ssub.s32 %s24, 2
      %s40 = sadd.s32 1, %s33
      %p41 = scmp.ge.s32.totalorder %s40, 2
      %s42 = scalar_select %p41, 0, %s40
      %s43 = sadd.s32 1, %s32
      %s44 = scalar_select %p41, %s43, %s32
      %p45 = scmp.ge.s32.totalorder %s44, 3
      %s46 = scalar_select %p45, 0, %s44
      %s47 = sadd.s32 1, %s31
      %s48 = scalar_select %p45, %s47, %s31
      %p49 = scmp.ge.s32.totalorder %s48, 1
      %s50 = scalar_select %p49, 0, %s48
      %s51 = ssub.s32 %s32, %s46
      %p52 = scmp.eq.s32.totalorder %s51, 0
      %s54 = sadd.s32 %s53, 1
      %s55 = scalar_select %p52, %s53, %s54
      %p58 = pneg %p52
      %p59 = scmp.eq.s32.totalorder %s24, 5
      %p60 = por %p58, %p59
      %p61 = scmp.ne.s32.totalorder %s53, %s56
      %p62 = scmp.eq.s32.totalorder %s24, 0
      %p63 = por %p61, %p62
      %p64 = scmp.ne.s32.totalorder %s53, %s56
      %p65 = scmp.eq.s32.totalorder %s29, 5
      %p66 = por %p64, %p65
      %p67 = scmp.ne.s32.totalorder %s56, %s57
      %p68 = scmp.eq.s32.totalorder %s29, 0
      %p69 = por %p67, %p68
      %p70 = scmp.ne.s32.totalorder %s56, %s57
      %p71 = scmp.eq.s32.totalorder %s30, 5
      %p72 = por %p70, %p71
      %p74 = scmp.ne.s32.totalorder %s57, %s73
      %p75 = scmp.eq.s32.totalorder %s30, 0
      %p76 = por %p74, %p75
      %s78 = sadd.s32 %s77, 1
      %p81 = scmp.eq.s32.totalorder %s24, 5
      %p82 = scmp.ne.s32.totalorder %s77, %s79
      %p83 = scmp.eq.s32.totalorder %s24, 0
      %p84 = por %p82, %p83
      %p85 = scmp.ne.s32.totalorder %s77, %s79
      %p86 = scmp.eq.s32.totalorder %s29, 5
      %p87 = por %p85, %p86
      %p88 = scmp.ne.s32.totalorder %s79, %s80
      %p89 = scmp.eq.s32.totalorder %s29, 0
      %p90 = por %p88, %p89
      %p91 = scmp.ne.s32.totalorder %s79, %s80
      %p92 = scmp.eq.s32.totalorder %s30, 5
      %p93 = por %p91, %p92
      %p95 = scmp.ne.s32.totalorder %s80, %s94
      %p96 = scmp.eq.s32.totalorder %s30, 0
      %p97 = por %p95, %p96
      %s99 = sadd.s32 %s98, 1
      %p102 = scmp.eq.s32.totalorder %s24, 5
      %p103 = scmp.ne.s32.totalorder %s98, %s100
      %p104 = scmp.eq.s32.totalorder %s24, 0
      %p105 = por %p103, %p104
      %p106 = scmp.ne.s32.totalorder %s98, %s100
      %p107 = scmp.eq.s32.totalorder %s29, 5
      %p108 = por %p106, %p107
      %p109 = scmp.ne.s32.totalorder %s100, %s101
      %p110 = scmp.eq.s32.totalorder %s29, 0
      %p111 = por %p109, %p110
      %p112 = scmp.ne.s32.totalorder %s100, %s101
      %p113 = scmp.eq.s32.totalorder %s30, 5
      %p114 = por %p112, %p113
      %p116 = scmp.ne.s32.totalorder %s101, %s115
      %p117 = scmp.eq.s32.totalorder %s30, 0
      %p118 = por %p116, %p117
      %s120 = sadd.s32 %s119, 1
      %p123 = scmp.eq.s32.totalorder %s24, 5
      %p124 = scmp.ne.s32.totalorder %s119, %s121
      %p125 = scmp.eq.s32.totalorder %s24, 0
      %p126 = por %p124, %p125
      %p127 = scmp.ne.s32.totalorder %s119, %s121
      %p128 = scmp.eq.s32.totalorder %s29, 5
      %p129 = por %p127, %p128
      %p130 = scmp.ne.s32.totalorder %s121, %s122
      %p131 = scmp.eq.s32.totalorder %s29, 0
      %p132 = por %p130, %p131
      %p133 = scmp.ne.s32.totalorder %s121, %s122
      %p134 = scmp.eq.s32.totalorder %s30, 5
      %p135 = por %p133, %p134
      %p137 = scmp.ne.s32.totalorder %s122, %s136
      %p138 = scmp.eq.s32.totalorder %s30, 0
      %p139 = por %p137, %p138
      %s141 = sadd.s32 %s140, 1
      %p144 = scmp.eq.s32.totalorder %s24, 5
      %p145 = scmp.ne.s32.totalorder %s140, %s142
      %p146 = scmp.eq.s32.totalorder %s24, 0
      %p147 = por %p145, %p146
      %p148 = scmp.ne.s32.totalorder %s140, %s142
      %p149 = scmp.eq.s32.totalorder %s29, 5
      %p150 = por %p148, %p149
      %p151 = scmp.ne.s32.totalorder %s142, %s143
      %p152 = scmp.eq.s32.totalorder %s29, 0
      %p153 = por %p151, %p152
      %p154 = scmp.ne.s32.totalorder %s142, %s143
      %p155 = scmp.eq.s32.totalorder %s30, 5
      %p156 = por %p154, %p155
      %p158 = scmp.ne.s32.totalorder %s143, %s157
      %p159 = scmp.eq.s32.totalorder %s30, 0
      %p160 = por %p158, %p159
      %s161 = smul.u32 %s31, 2
      %s162 = sadd.s32 %s161, %s33
      %s163 = smul.u32 %s50, 2
      %s164 = sadd.s32 %s163, %s42
      %s165 = ssub.s32 %s162, %s164
      %p166 = scmp.eq.s32.totalorder %s165, 0
      %s168 = sadd.s32 %s167, 1
      %s169 = scalar_select %p166, %s167, %s168
      %p172 = pneg %p166
      %p173 = scmp.eq.s32.totalorder %s24, 5
      %p174 = por %p172, %p173
      %p175 = scmp.ne.s32.totalorder %s167, %s170
      %p176 = scmp.eq.s32.totalorder %s24, 0
      %p177 = por %p175, %p176
      %p178 = scmp.ne.s32.totalorder %s167, %s170
      %p179 = scmp.eq.s32.totalorder %s29, 5
      %p180 = por %p178, %p179
      %p181 = scmp.ne.s32.totalorder %s170, %s171
      %p182 = scmp.eq.s32.totalorder %s29, 0
      %p183 = por %p181, %p182
      %p184 = scmp.ne.s32.totalorder %s170, %s171
      %p185 = scmp.eq.s32.totalorder %s30, 5
      %p186 = por %p184, %p185
      %p188 = scmp.ne.s32.totalorder %s171, %s187
      %p189 = scmp.eq.s32.totalorder %s30, 0
      %p190 = por %p188, %p189
      %s191 = smul.u32 %s31, 2
      %s192 = sadd.s32 %s191, %s33
      %s193 = smul.u32 %s50, 2
      %s194 = sadd.s32 %s193, %s42
      %s195 = ssub.s32 %s192, %s194
      %p196 = scmp.eq.s32.totalorder %s195, 0
      %s198 = sadd.s32 %s197, 1
      %s199 = scalar_select %p196, %s197, %s198
      %p202 = pneg %p196
      %p203 = scmp.eq.s32.totalorder %s24, 5
      %p204 = por %p202, %p203
      %p205 = scmp.ne.s32.totalorder %s197, %s200
      %p206 = scmp.eq.s32.totalorder %s24, 0
      %p207 = por %p205, %p206
      %p208 = scmp.ne.s32.totalorder %s197, %s200
      %p209 = scmp.eq.s32.totalorder %s29, 5
      %p210 = por %p208, %p209
      %p211 = scmp.ne.s32.totalorder %s200, %s201
      %p212 = scmp.eq.s32.totalorder %s29, 0
      %p213 = por %p211, %p212
      %p214 = scmp.ne.s32.totalorder %s200, %s201
      %p215 = scmp.eq.s32.totalorder %s30, 5
      %p216 = por %p214, %p215
      %p218 = scmp.ne.s32.totalorder %s201, %s217
      %p219 = scmp.eq.s32.totalorder %s30, 0
      %p220 = por %p218, %p219
      %s221 = smul.u32 %s31, 2
      %s222 = sadd.s32 %s221, %s33
      %s223 = smul.u32 %s50, 2
      %s224 = sadd.s32 %s223, %s42
      %s225 = ssub.s32 %s32, %s46
      %s226 = ssub.s32 %s222, %s224
      %s227 = sor.u32 %s225, %s226
      %p228 = scmp.eq.s32.totalorder %s227, 0
      %s230 = sadd.s32 %s229, 1
      %s231 = scalar_select %p228, %s229, %s230
      %p234 = pneg %p228
      %p235 = scmp.eq.s32.totalorder %s24, 5
      %p236 = por %p234, %p235
      %p237 = scmp.ne.s32.totalorder %s229, %s232
      %p238 = scmp.eq.s32.totalorder %s24, 0
      %p239 = por %p237, %p238
      %p240 = scmp.ne.s32.totalorder %s229, %s232
      %p241 = scmp.eq.s32.totalorder %s29, 5
      %p242 = por %p240, %p241
      %p243 = scmp.ne.s32.totalorder %s232, %s233
      %p244 = scmp.eq.s32.totalorder %s29, 0
      %p245 = por %p243, %p244
      %p246 = scmp.ne.s32.totalorder %s232, %s233
      %p247 = scmp.eq.s32.totalorder %s30, 5
      %p248 = por %p246, %p247
      %p250 = scmp.ne.s32.totalorder %s233, %s249
      %p251 = scmp.eq.s32.totalorder %s30, 0
      %p252 = por %p250, %p251
      %p253 = scmp.le.s32.totalorder 1, %s24
      %p254 = scmp.lt.s32.totalorder %s24, 7
      %p255 = pnand %p253, %p254
      %p256 = pneg %p255
      // Predicated region
      $region9: #{tpu_custom_call.1} parent=5 // pred_check
        _
      $region10: #{tpu_custom_call.1} parent=5 // pred_check_branch
        %258 = sbr.rel (%p255) target = $region12
      $region11: #{tpu_custom_call.1} parent=5 // pred_region
        %s259 = ssub.s32 %s24, 1
        // Predicated region
        $region13: #{tpu_custom_call.1} parent=11 // pred_check
          %p260 = pneg %p90
        $region14: #{tpu_custom_call.1} parent=11 // pred_check_branch
          %262 = sbr.rel (%p260) target = $region16
        $region15: #{tpu_custom_call.1} parent=11 // pred_region
          %s264 = ssub.s32 2048, 2048
          %265 = vsyncadd [#allocation7], %s264
          %s266 = sshll.u32 [#allocation6], 4
          %s267 = int_to_ptr.vmem [resolvable:$true] %s266
          %272 = dma.hbm_to_vmem [thread:$0]  %s1, 2048, %s267, [#allocation7], 128, 128, 8
        $region16: #{tpu_custom_call.1} parent=11 // pred_fallthru
          _
        // Predicated region
        $region17: #{tpu_custom_call.1} parent=11 // pred_check
          %p273 = pneg %p111
        $region18: #{tpu_custom_call.1} parent=11 // pred_check_branch
          %275 = sbr.rel (%p273) target = $region20
        $region19: #{tpu_custom_call.1} parent=11 // pred_region
          %s277 = ssub.s32 16, 16
          %278 = vsyncadd [#allocation7], %s277
          %s280 = sshll.u32 [#allocation8], 4
          %s281 = int_to_ptr.vmem [resolvable:$true] %s280
          %283 = dma.hbm_to_vmem [thread:$0]  %s2, 16, %s281, [#allocation7]
        $region20: #{tpu_custom_call.1} parent=11 // pred_fallthru
          _
        // Predicated region
        $region21: #{tpu_custom_call.1} parent=11 // pred_check
          %p284 = pneg %p132
        $region22: #{tpu_custom_call.1} parent=11 // pred_check_branch
          %286 = sbr.rel (%p284) target = $region24
        $region23: #{tpu_custom_call.1} parent=11 // pred_region
          %s288 = ssub.s32 16, 16
          %289 = vsyncadd [#allocation10], %s288
          %s291 = sshll.u32 [#allocation9], 4
          %s292 = int_to_ptr.vmem [resolvable:$true] %s291
          %294 = dma.hbm_to_vmem [thread:$0]  %s3, 16, %s292, [#allocation10]
        $region24: #{tpu_custom_call.1} parent=11 // pred_fallthru
          _
        // Predicated region
        $region25: #{tpu_custom_call.1} parent=11 // pred_check
          %p295 = pneg %p153
        $region26: #{tpu_custom_call.1} parent=11 // pred_check_branch
          %297 = sbr.rel (%p295) target = $region28
        $region27: #{tpu_custom_call.1} parent=11 // pred_region
          %s299 = ssub.s32 16, 16
          %300 = vsyncadd [#allocation10], %s299
          %s302 = sshll.u32 [#allocation11], 4
          %s303 = int_to_ptr.vmem [resolvable:$true] %s302
          %305 = dma.hbm_to_vmem [thread:$0]  %s4, 16, %s303, [#allocation10]
        $region28: #{tpu_custom_call.1} parent=11 // pred_fallthru
          _
      $region12: #{tpu_custom_call.1} parent=5 // pred_fallthru
        _
      %p306 = scmp.lt.s32.totalorder %s24, 6
      // Predicated region
      $region29: #{tpu_custom_call.1} parent=5 // pred_check
        %p307 = pneg %p306
      $region30: #{tpu_custom_call.1} parent=5 // pred_check_branch
        %309 = sbr.rel (%p307) target = $region32
      $region31: #{tpu_custom_call.1} parent=5 // pred_region
        // Predicated region
        $region33: #{tpu_custom_call.1} parent=31 // pred_check
          %p310 = pneg %p63
        $region34: #{tpu_custom_call.1} parent=31 // pred_check_branch
          %312 = sbr.rel (%p310) target = $region36
        $region35: #{tpu_custom_call.1} parent=31 // pred_region
          %s313 = sand.u32 %s53, 1
          %s314 = scalar_lea.sflag [#allocation4], %s313
          %s315 = sand.u32 %s53, 1
          %s316 = smul.addr %s315, 8
          %s317 = scalar_lea.vmem [#allocation3], %s316
          %s319 = ssub.s32 128, 128
          %320 = vsyncadd %s314, %s319
          %s321 = smul.addr %s32, 128
          %s322 = scalar_lea.hbm %s0, %s321
          %s324 = sshll.u32 %s317, 4
          %s325 = int_to_ptr.vmem [resolvable:$true] %s324
          %327 = dma.hbm_to_vmem [thread:$0]  %s322, 128, %s325, %s314
        $region36: #{tpu_custom_call.1} parent=31 // pred_fallthru
          _
        // Predicated region
        $region37: #{tpu_custom_call.1} parent=31 // pred_check
          %p328 = pneg %p177
        $region38: #{tpu_custom_call.1} parent=31 // pred_check_branch
          %330 = sbr.rel (%p328) target = $region40
        $region39: #{tpu_custom_call.1} parent=31 // pred_region
          %s331 = sand.u32 %s24, 1
          %s332 = scalar_lea.sflag [#allocation13], %s331
          %s333 = sand.u32 %s167, 1
          %s334 = smul.addr %s333, 128
          %s335 = scalar_lea.vmem [#allocation12], %s334
          %s336 = smul.u32 %s31, 2
          %s337 = sadd.s32 %s336, %s33
          %s339 = ssub.s32 2048, 2048
          %340 = vsyncadd %s332, %s339
          %s341 = smul.addr %s337, 128
          %s342 = scalar_lea.hbm %s5, %s341
          %s343 = sshll.u32 %s335, 4
          %s344 = int_to_ptr.vmem [resolvable:$true] %s343
          %349 = dma.hbm_to_vmem [thread:$0]  %s342, 2048, %s344, %s332, 256, 128, 8
        $region40: #{tpu_custom_call.1} parent=31 // pred_fallthru
          _
        // Predicated region
        $region41: #{tpu_custom_call.1} parent=31 // pred_check
          %p350 = pneg %p207
        $region42: #{tpu_custom_call.1} parent=31 // pred_check_branch
          %352 = sbr.rel (%p350) target = $region44
        $region43: #{tpu_custom_call.1} parent=31 // pred_region
          %s353 = sand.u32 %s24, 1
          %s354 = scalar_lea.sflag [#allocation13], %s353
          %s355 = sand.u32 %s197, 1
          %s356 = scalar_lea.vmem [#allocation14], %s355
          %s357 = smul.u32 %s31, 2
          %s358 = sadd.s32 %s357, %s33
          %s360 = ssub.s32 16, 16
          %361 = vsyncadd %s354, %s360
          %s362 = smul.addr %s358, 16
          %s363 = scalar_lea.hbm %s6, %s362
          %s365 = sshll.u32 %s356, 4
          %s366 = int_to_ptr.vmem [resolvable:$true] %s365
          %368 = dma.hbm_to_vmem [thread:$0]  %s363, 16, %s366, %s354
        $region44: #{tpu_custom_call.1} parent=31 // pred_fallthru
          _
      $region32: #{tpu_custom_call.1} parent=5 // pred_fallthru
        _
      %p369 = scmp.le.s32.totalorder 1, %s24
      %p370 = scmp.lt.s32.totalorder %s24, 7
      %p371 = pnand %p369, %p370
      %p372 = pneg %p371
      // Predicated region
      $region45: #{tpu_custom_call.1} parent=5 // pred_check
        _
      $region46: #{tpu_custom_call.1} parent=5 // pred_check_branch
        %374 = sbr.rel (%p371) target = $region48
      $region47: #{tpu_custom_call.1} parent=5 // pred_region
        %s375 = ssub.s32 %s24, 1
        %s376 = sand.u32 %s56, 1
        %s377 = scalar_lea.sflag [#allocation4], %s376
        %s378 = sand.u32 %s56, 1
        %s379 = smul.addr %s378, 8
        %s380 = scalar_lea.vmem [#allocation3], %s379
        // Predicated region
        $region49: #{tpu_custom_call.1} parent=47 // pred_check
          %p381 = pneg %p69
        $region50: #{tpu_custom_call.1} parent=47 // pred_check_branch
          %383 = sbr.rel (%p381) target = $region52
        $region51: #{tpu_custom_call.1} parent=47 // pred_region
          %384 = dma.done %s377, 128
        $region52: #{tpu_custom_call.1} parent=47 // pred_fallthru
          _
        // Predicated region
        $region53: #{tpu_custom_call.1} parent=47 // pred_check
          %p385 = pneg %p90
        $region54: #{tpu_custom_call.1} parent=47 // pred_check_branch
          %387 = sbr.rel (%p385) target = $region56
        $region55: #{tpu_custom_call.1} parent=47 // pred_region
          %388 = dma.done [#allocation7], 2048
        $region56: #{tpu_custom_call.1} parent=47 // pred_fallthru
          _
        // Predicated region
        $region57: #{tpu_custom_call.1} parent=47 // pred_check
          %p389 = pneg %p111
        $region58: #{tpu_custom_call.1} parent=47 // pred_check_branch
          %391 = sbr.rel (%p389) target = $region60
        $region59: #{tpu_custom_call.1} parent=47 // pred_region
          %392 = dma.done [#allocation7], 16
        $region60: #{tpu_custom_call.1} parent=47 // pred_fallthru
          _
        // Predicated region
        $region61: #{tpu_custom_call.1} parent=47 // pred_check
          %p393 = pneg %p132
        $region62: #{tpu_custom_call.1} parent=47 // pred_check_branch
          %395 = sbr.rel (%p393) target = $region64
        $region63: #{tpu_custom_call.1} parent=47 // pred_region
          %396 = dma.done [#allocation10], 16
        $region64: #{tpu_custom_call.1} parent=47 // pred_fallthru
          _
        // Predicated region
        $region65: #{tpu_custom_call.1} parent=47 // pred_check
          %p397 = pneg %p153
        $region66: #{tpu_custom_call.1} parent=47 // pred_check_branch
          %399 = sbr.rel (%p397) target = $region68
        $region67: #{tpu_custom_call.1} parent=47 // pred_region
          %400 = dma.done [#allocation10], 16
        $region68: #{tpu_custom_call.1} parent=47 // pred_fallthru
          _
        %s401 = sand.u32 %s29, 1
        %s402 = scalar_lea.sflag [#allocation13], %s401
        %s403 = sand.u32 %s170, 1
        %s404 = smul.addr %s403, 128
        %s405 = scalar_lea.vmem [#allocation12], %s404
        // Predicated region
        $region69: #{tpu_custom_call.1} parent=47 // pred_check
          %p406 = pneg %p183
        $region70: #{tpu_custom_call.1} parent=47 // pred_check_branch
          %408 = sbr.rel (%p406) target = $region72
        $region71: #{tpu_custom_call.1} parent=47 // pred_region
          %409 = dma.done %s402, 2048
        $region72: #{tpu_custom_call.1} parent=47 // pred_fallthru
          _
        %s410 = sand.u32 %s29, 1
        %s411 = scalar_lea.sflag [#allocation13], %s410
        %s412 = sand.u32 %s200, 1
        %s413 = scalar_lea.vmem [#allocation14], %s412
        // Predicated region
        $region73: #{tpu_custom_call.1} parent=47 // pred_check
          %p414 = pneg %p213
        $region74: #{tpu_custom_call.1} parent=47 // pred_check_branch
          %416 = sbr.rel (%p414) target = $region76
        $region75: #{tpu_custom_call.1} parent=47 // pred_region
          %417 = dma.done %s411, 16
        $region76: #{tpu_custom_call.1} parent=47 // pred_fallthru
          _
        %s418 = sand.u32 %s56, 1
        %s419 = scalar_lea.sflag [#allocation4], %s418
        %s420 = sand.u32 %s56, 1
        %s421 = smul.addr %s420, 8
        %s422 = scalar_lea.vmem [#allocation3], %s421
        %p423 = pneg %p69
        %p424 = pneg %p66
        %p425 = pneg %p90
        %p426 = pneg %p87
        %p427 = pneg %p111
        %p428 = pneg %p108
        %p429 = pneg %p132
        %p430 = pneg %p129
        %p431 = pneg %p153
        %p432 = pneg %p150
        %s433 = sand.u32 %s29, 1
        %s434 = scalar_lea.sflag [#allocation13], %s433
        %s435 = sand.u32 %s170, 1
        %s436 = smul.addr %s435, 128
        %s437 = scalar_lea.vmem [#allocation12], %s436
        %p438 = pneg %p183
        %p439 = pneg %p180
        %s440 = sand.u32 %s29, 1
        %s441 = scalar_lea.sflag [#allocation13], %s440
        %s442 = sand.u32 %s200, 1
        %s443 = scalar_lea.vmem [#allocation14], %s442
        %p444 = pneg %p213
        %p445 = pneg %p210
        %p446 = pneg %p245
        %p447 = pneg %p242
        %s448 = sand.u32 %s232, 1
        %s449 = scalar_lea.sflag [#allocation5], %s448
        %s450 = sand.u32 %s232, 1
        %s451 = smul.addr %s450, 8
        %s452 = scalar_lea.vmem [#allocation15], %s451
        %s453 = smul.u32 %s34, 2
        %s454 = sadd.s32 %s453, %s36
        %s455 = smul.u32 %s34, 2
        %s456 = sadd.s32 %s455, %s36
        %s457 = smul.u32 %s34, 2
        %s458 = sadd.s32 %s457, %s36
        %p459 = scmp.eq.s32.totalorder %s36, 0
        // Predicated region
        $region77: #{tpu_custom_call.1} parent=47 // pred_check
          %p460 = pneg %p459
        $region78: #{tpu_custom_call.1} parent=47 // pred_check_branch
          %462 = sbr.rel (%p460) target = $region80
        $region79: #{tpu_custom_call.1} parent=47 // pred_region
          %v463 = vld [vmem:[#allocation6] sm:$0xff]
          %v464 = vld [vmem:[#allocation6 + $0x8] sm:$0xff]
          %v465 = vld [vmem:[#allocation6 + $0x10] sm:$0xff]
          %v466 = vld [vmem:[#allocation6 + $0x18] sm:$0xff]
          %v467 = vld [vmem:[#allocation6 + $0x20] sm:$0xff]
          %v468 = vld [vmem:[#allocation6 + $0x28] sm:$0xff]
          %v469 = vld [vmem:[#allocation6 + $0x30] sm:$0xff]
          %v470 = vld [vmem:[#allocation6 + $0x38] sm:$0xff]
          %v471 = vld [vmem:[#allocation6 + $0x40] sm:$0xff]
          %v472 = vld [vmem:[#allocation6 + $0x48] sm:$0xff]
          %v473 = vld [vmem:[#allocation6 + $0x50] sm:$0xff]
          %v474 = vld [vmem:[#allocation6 + $0x58] sm:$0xff]
          %v475 = vld [vmem:[#allocation6 + $0x60] sm:$0xff]
          %v476 = vld [vmem:[#allocation6 + $0x68] sm:$0xff]
          %v477 = vld [vmem:[#allocation6 + $0x70] sm:$0xff]
          %v478 = vld [vmem:[#allocation6 + $0x78] sm:$0xff]
          %v479 = vld [vmem:[%s380] sm:$0xff]
          %v480 = vld [vmem:[#allocation8] sm:$0x1]
          %v482 = vlaneseq
          %v483 = vshrl.u32 %v482, 7
          %v484 = vsub.s32 0, %v483
          %v485 = vrot.slane %v480, %v484
          %487 = vmatprep.subr.mxu0 0.0
          %488 = vmatpush1.msra.mxu0 %v463
          %489 = vmatprep.subr.mxu0 0.0
          %490 = vmatpush1.msra.mxu0 %v464
          %491 = vmatprep.subr.mxu0 0.0
          %492 = vmatpush1.msra.mxu0 %v465
          %493 = vmatprep.subr.mxu0 0.0
          %494 = vmatpush1.msra.mxu0 %v466
          %495 = vmatprep.subr.mxu0 0.0
          %496 = vmatpush1.msra.mxu0 %v467
          %497 = vmatprep.subr.mxu0 0.0
          %498 = vmatpush1.msra.mxu0 %v468
          %499 = vmatprep.subr.mxu0 0.0
          %500 = vmatpush1.msra.mxu0 %v469
          %501 = vmatprep.subr.mxu0 0.0
          %502 = vmatpush1.msra.mxu0 %v470
          %503 = vmatprep.subr.mxu0 0.0
          %504 = vmatpush1.msra.mxu0 %v471
          %505 = vmatprep.subr.mxu0 0.0
          %506 = vmatpush1.msra.mxu0 %v472
          %507 = vmatprep.subr.mxu0 0.0
          %508 = vmatpush1.msra.mxu0 %v473
          %509 = vmatprep.subr.mxu0 0.0
          %510 = vmatpush1.msra.mxu0 %v474
          %511 = vmatprep.subr.mxu0 0.0
          %512 = vmatpush1.msra.mxu0 %v475
          %513 = vmatprep.subr.mxu0 0.0
          %514 = vmatpush1.msra.mxu0 %v476
          %515 = vmatprep.subr.mxu0 0.0
          %516 = vmatpush1.msra.mxu0 %v477
          %517 = vmatprep.subr.mxu0 0.0
          %518 = vmatpush1.msra.mxu0 %v478
          %519 = vmatprep.subr.mxu0 0.0
          %520 = vmatpush1.msra.mxu0 0.0
          %521 = vmatprep.subr.mxu0 0.0
          %522 = vmatpush1.msra.mxu0 0.0
          %523 = vmatprep.subr.mxu0 0.0
          %524 = vmatpush1.msra.mxu0 0.0
          %525 = vmatprep.subr.mxu0 0.0
          %526 = vmatpush1.msra.mxu0 0.0
          %527 = vmatprep.subr.mxu0 0.0
          %528 = vmatpush1.msra.mxu0 0.0
          %529 = vmatprep.subr.mxu0 0.0
          %530 = vmatpush1.msra.mxu0 0.0
          %531 = vmatprep.subr.mxu0 0.0
          %532 = vmatpush1.msra.mxu0 0.0
          %533 = vmatprep.subr.mxu0 0.0
          %534 = vmatpush1.msra.mxu0 0.0
          %535 = vmatprep.subr.mxu0 0.0
          %536 = vmatpush1.msra.mxu0 0.0
          %537 = vmatprep.subr.mxu0 0.0
          %538 = vmatpush1.msra.mxu0 0.0
          %539 = vmatprep.subr.mxu0 0.0
          %540 = vmatpush1.msra.mxu0 0.0
          %541 = vmatprep.subr.mxu0 0.0
          %542 = vmatpush1.msra.mxu0 0.0
          %543 = vmatprep.subr.mxu0 0.0
          %544 = vmatpush1.msra.mxu0 0.0
          %545 = vmatprep.subr.mxu0 0.0
          %546 = vmatpush1.msra.mxu0 0.0
          %547 = vmatprep.subr.mxu0 0.0
          %548 = vmatpush1.msra.mxu0 0.0
          %549 = vmatprep.subr.mxu0 0.0
          %550 = vmatpush1.msra.mxu0 0.0
          %551 = vmatprep.mubr.f32.mxu0 0.0
          %552 = vmatmul.mubr.f32.gmra.mrb[0].mxu0 %v479
          %v553 = vpop.f32.mrb[0].mxu0
          %v554 = vadd.f32 %v485, %v553
          %v555 = vpop.f32.mrb[0].mxu0
          %556 = vdwg.mxu0
          %v557 = vmul.f32 %v554, 0.5
          %v558 = vmul.f32 %v554, 0.70710677
          %v559 = verf.f32.pop %v558
          %v560 = vadd.f32 %v559, 1.0
          %v561 = vmul.f32 %v557, %v560
          %562 = vadd.xlane.f32.xlu0 %v561
          %v563 = vpop.xlane.xlu0 %562
          %v564 = vrcp.pop 128.0
          %v565 = vmul.f32 %v563, %v564
          %v566 = vsub.f32 %v561, %v565
          %v567 = vmul.f32 %v566, %v566
          %568 = vadd.xlane.f32.xlu0 %v567
          %v569 = vpop.xlane.xlu0 %568
          %v570 = vmul.f32 %v569, %v564
          %v571 = vadd.f32 %v570, 1e-05
          %v572 = vrsqrt.pop %v571
          %v573 = vmul.f32 %v566, %v572
          %v574 = vld [vmem:[#allocation9] sm:$0x1]
          %v576 = vlaneseq
          %v577 = vshrl.u32 %v576, 7
          %v578 = vsub.s32 0, %v577
          %v579 = vrot.slane %v574, %v578
          %v581 = vmul.f32 %v573, %v579
          %v582 = vld [vmem:[#allocation11] sm:$0x1]
          %v584 = vlaneseq
          %v585 = vshrl.u32 %v584, 7
          %v586 = vsub.s32 0, %v585
          %v587 = vrot.slane %v582, %v586
          %v589 = vadd.f32 %v581, %v587
          %590 = vst [vmem:[#allocation2] sm:$0xff] %v589
        $region80: #{tpu_custom_call.1} parent=47 // pred_fallthru
          _
        %v591 = vld [vmem:[#allocation2] sm:$0xff]
        %v592 = vld [vmem:[%s405] sm:$0xff]
        %v593 = vld [vmem:[%s405 + $0x8] sm:$0xff]
        %v594 = vld [vmem:[%s405 + $0x10] sm:$0xff]
        %v595 = vld [vmem:[%s405 + $0x18] sm:$0xff]
        %v596 = vld [vmem:[%s405 + $0x20] sm:$0xff]
        %v597 = vld [vmem:[%s405 + $0x28] sm:$0xff]
        %v598 = vld [vmem:[%s405 + $0x30] sm:$0xff]
        %v599 = vld [vmem:[%s405 + $0x38] sm:$0xff]
        %v600 = vld [vmem:[%s405 + $0x40] sm:$0xff]
        %v601 = vld [vmem:[%s405 + $0x48] sm:$0xff]
        %v602 = vld [vmem:[%s405 + $0x50] sm:$0xff]
        %v603 = vld [vmem:[%s405 + $0x58] sm:$0xff]
        %v604 = vld [vmem:[%s405 + $0x60] sm:$0xff]
        %v605 = vld [vmem:[%s405 + $0x68] sm:$0xff]
        %v606 = vld [vmem:[%s405 + $0x70] sm:$0xff]
        %v607 = vld [vmem:[%s405 + $0x78] sm:$0xff]
        %v608 = vld [vmem:[%s413] sm:$0x1]
        %v610 = vlaneseq
        %v611 = vshrl.u32 %v610, 7
        %v612 = vsub.s32 0, %v611
        %v613 = vrot.slane %v608, %v612
        %615 = vmatprep.subr.mxu0 0.0
        %616 = vmatpush1.msra.mxu0 %v592
        %617 = vmatprep.subr.mxu0 0.0
        %618 = vmatpush1.msra.mxu0 %v593
        %619 = vmatprep.subr.mxu0 0.0
        %620 = vmatpush1.msra.mxu0 %v594
        %621 = vmatprep.subr.mxu0 0.0
        %622 = vmatpush1.msra.mxu0 %v595
        %623 = vmatprep.subr.mxu0 0.0
        %624 = vmatpush1.msra.mxu0 %v596
        %625 = vmatprep.subr.mxu0 0.0
        %626 = vmatpush1.msra.mxu0 %v597
        %627 = vmatprep.subr.mxu0 0.0
        %628 = vmatpush1.msra.mxu0 %v598
        %629 = vmatprep.subr.mxu0 0.0
        %630 = vmatpush1.msra.mxu0 %v599
        %631 = vmatprep.subr.mxu0 0.0
        %632 = vmatpush1.msra.mxu0 %v600
        %633 = vmatprep.subr.mxu0 0.0
        %634 = vmatpush1.msra.mxu0 %v601
        %635 = vmatprep.subr.mxu0 0.0
        %636 = vmatpush1.msra.mxu0 %v602
        %637 = vmatprep.subr.mxu0 0.0
        %638 = vmatpush1.msra.mxu0 %v603
        %639 = vmatprep.subr.mxu0 0.0
        %640 = vmatpush1.msra.mxu0 %v604
        %641 = vmatprep.subr.mxu0 0.0
        %642 = vmatpush1.msra.mxu0 %v605
        %643 = vmatprep.subr.mxu0 0.0
        %644 = vmatpush1.msra.mxu0 %v606
        %645 = vmatprep.subr.mxu0 0.0
        %646 = vmatpush1.msra.mxu0 %v607
        %647 = vmatprep.subr.mxu0 0.0
        %648 = vmatpush1.msra.mxu0 0.0
        %649 = vmatprep.subr.mxu0 0.0
        %650 = vmatpush1.msra.mxu0 0.0
        %651 = vmatprep.subr.mxu0 0.0
        %652 = vmatpush1.msra.mxu0 0.0
        %653 = vmatprep.subr.mxu0 0.0
        %654 = vmatpush1.msra.mxu0 0.0
        %655 = vmatprep.subr.mxu0 0.0
        %656 = vmatpush1.msra.mxu0 0.0
        %657 = vmatprep.subr.mxu0 0.0
        %658 = vmatpush1.msra.mxu0 0.0
        %659 = vmatprep.subr.mxu0 0.0
        %660 = vmatpush1.msra.mxu0 0.0
        %661 = vmatprep.subr.mxu0 0.0
        %662 = vmatpush1.msra.mxu0 0.0
        %663 = vmatprep.subr.mxu0 0.0
        %664 = vmatpush1.msra.mxu0 0.0
        %665 = vmatprep.subr.mxu0 0.0
        %666 = vmatpush1.msra.mxu0 0.0
        %667 = vmatprep.subr.mxu0 0.0
        %668 = vmatpush1.msra.mxu0 0.0
        %669 = vmatprep.subr.mxu0 0.0
        %670 = vmatpush1.msra.mxu0 0.0
        %671 = vmatprep.subr.mxu0 0.0
        %672 = vmatpush1.msra.mxu0 0.0
        %673 = vmatprep.subr.mxu0 0.0
        %674 = vmatpush1.msra.mxu0 0.0
        %675 = vmatprep.subr.mxu0 0.0
        %676 = vmatpush1.msra.mxu0 0.0
        %677 = vmatprep.subr.mxu0 0.0
        %678 = vmatpush1.msra.mxu0 0.0
        %679 = vmatprep.mubr.f32.mxu0 0.0
        %680 = vmatmul.mubr.f32.gmra.mrb[0].mxu0 %v591
        %v681 = vpop.f32.mrb[0].mxu0
        %v682 = vadd.f32 %v613, %v681
        %v683 = vpop.f32.mrb[0].mxu0
        %684 = vdwg.mxu0
        %685 = vst [vmem:[%s452] sm:$0xff] %v682
        %s686 = sand.u32 %s232, 1
        %s687 = scalar_lea.sflag [#allocation5], %s686
        %s688 = sand.u32 %s232, 1
        %s689 = smul.addr %s688, 8
        %s690 = scalar_lea.vmem [#allocation15], %s689
        // Predicated region
        $region81: #{tpu_custom_call.1} parent=47 // pred_check
          %p691 = pneg %p242
        $region82: #{tpu_custom_call.1} parent=47 // pred_check_branch
          %693 = sbr.rel (%p691) target = $region84
        $region83: #{tpu_custom_call.1} parent=47 // pred_region
          %s694 = smul.u32 %s34, 2
          %s695 = sadd.s32 %s694, %s36
          %s697 = ssub.s32 128, 128
          %698 = vsyncadd %s687, %s697
          %s699 = smul.addr %s35, 2
          %s700 = sadd.s32 %s695, %s699
          %s701 = smul.addr %s700, 128
          %s702 = scalar_lea.hbm %s7, %s701
          %s704 = sshll.u32 %s690, 4
          %s705 = int_to_ptr.vmem [resolvable:$true] %s704
          %707 = dma.vmem_to_hbm [thread:$0]  %s705, 128, %s702, %s687
        $region84: #{tpu_custom_call.1} parent=47 // pred_fallthru
          _
      $region48: #{tpu_custom_call.1} parent=5 // pred_fallthru
        _
      %p708 = scmp.le.s32.totalorder 2, %s24
      // Predicated region
      $region85: #{tpu_custom_call.1} parent=5 // pred_check
        %p709 = pneg %p708
      $region86: #{tpu_custom_call.1} parent=5 // pred_check_branch
        %711 = sbr.rel (%p709) target = $region88
      $region87: #{tpu_custom_call.1} parent=5 // pred_region
        %s712 = ssub.s32 %s24, 2
        // Predicated region
        $region89: #{tpu_custom_call.1} parent=87 // pred_check
          %p713 = pneg %p248
        $region90: #{tpu_custom_call.1} parent=87 // pred_check_branch
          %715 = sbr.rel (%p713) target = $region92
        $region91: #{tpu_custom_call.1} parent=87 // pred_region
          %s716 = sand.u32 %s233, 1
          %s717 = scalar_lea.sflag [#allocation5], %s716
          %s718 = sand.u32 %s233, 1
          %s719 = smul.addr %s718, 8
          %s720 = scalar_lea.vmem [#allocation15], %s719
          %721 = dma.done %s717, 128
        $region92: #{tpu_custom_call.1} parent=87 // pred_fallthru
          _
      $region88: #{tpu_custom_call.1} parent=5 // pred_fallthru
        _
    $region6: #{tpu_custom_call.1} parent=1 // loop_footer
      %s28 = sadd.s32 1, %s24
    $region7: #{tpu_custom_call.1} parent=1 // loop_footer_branch
      %23 = sbr.rel target = $region3
    $region8: #{tpu_custom_call.1} parent=1 // loop_exit
      _
    %722 = vsyncpa [#allocation4], 1
    %s723 = scalar_lea.sflag [#allocation4], 1
    %724 = vsyncpa %s723, 1
    %725 = vsyncpa [#allocation7], 1
    %726 = vsyncpa [#allocation10], 1
    %727 = vsyncpa [#allocation13], 1
    %s728 = scalar_lea.sflag [#allocation13], 1
    %729 = vsyncpa %s728, 1
    %730 = vsyncpa [#allocation5], 1
    %s731 = scalar_lea.sflag [#allocation5], 1
    %732 = vsyncpa %s731, 1

</llo_original>
